<compile_context>
chip_gen: v6e
topology: v6e:2x2x1
jax: 0.10.0
libtpu: 0.0.40
codegen_flags: <defaults>
</compile_context>

<pallas_src>
import jax
import jax.numpy as jnp
from jax.experimental import pallas as pl
from jax.experimental.pallas import tpu as pltpu


# ----------------------------- config ---------------------------------------
class ViltConfig:
    def __init__(self):
        self.vilt_hidden_size = 32
        self.vilt_hidden_dropout_prob = 0.0   # dropout = identity at inference


# ----------------------------- kernel ---------------------------------------
def self_output_kernel(x_ref, w_ref, b_ref, o_ref):
    # x_ref: (tm, H)  w_ref: (H, H)  b_ref: (1, H)  o_ref: (tm, H)
    o_ref[...] = (
        jnp.dot(x_ref[...], w_ref[...], preferred_element_type=jnp.float32)
        + b_ref[...]
    )


# ----------------------------- wrapper ---------------------------------------
def vilt_self_output(hidden_states, input_tensor, weight, bias, *, block_m=None):
    """ViltSelfOutput.forward.

    hidden_states: (B, S, H) f32
    input_tensor:  (B, S, H) — unused here (residual is applied in ViltLayer)
    weight:        (H, H) pre-transposed [in, out] so y = x @ W + b
    bias:          (1, H)
    Dropout is identity (inference).
    """
    del input_tensor  # residual connection lives in ViltLayer, not here
    B, S, H = hidden_states.shape
    M = B * S
    x2d = hidden_states.reshape(M, H)          # fold batch: one tall matmul

    if block_m is None or block_m >= M:
        block_m = M                            # whole problem in one grid step
    grid = (pl.cdiv(M, block_m),)

    cost = pl.CostEstimate(
        flops=2 * M * H * H,
        transcendentals=0,
        bytes_accessed=4 * (M * H + H * H + H + M * H),
    )

    out2d = pl.pallas_call(
        self_output_kernel,
        out_shape=jax.ShapeDtypeStruct((M, H), jnp.float32),
        grid_spec=pltpu.PrefetchScalarGridSpec(
            num_scalar_prefetch=0,
            grid=grid,
            in_specs=[
                pl.BlockSpec((block_m, H), lambda i: (i, 0)),   # activations
                pl.BlockSpec((H, H), lambda i: (0, 0)),         # weight (grid-invariant)
                pl.BlockSpec((1, H), lambda i: (0, 0)),         # bias   (grid-invariant)
            ],
            out_specs=pl.BlockSpec((block_m, H), lambda i: (i, 0)),
        ),
        compiler_params=pltpu.CompilerParams(
            dimension_semantics=("parallel",)),
        cost_estimate=cost,
    )(x2d, weight, bias)

    return out2d.reshape(B, S, H)


# ----------------------------- main -------------------------------------------
if __name__ == "__main__":
    cfg = ViltConfig()
    B, S, H = 2, 8, cfg.vilt_hidden_size

    key = jax.random.PRNGKey(0)
    kx, kin, kw, kb = jax.random.split(key, 4)
    hidden_states = jax.random.normal(kx, (B, S, H), dtype=jnp.float32)
    input_tensor = jax.random.normal(kin, (B, S, H), dtype=jnp.float32)  # unused by forward
    weight = (0.02 * jax.random.normal(kw, (H, H))).astype(jnp.float32)  # [in, out]
    bias = (0.02 * jax.random.normal(kb, (1, H))).astype(jnp.float32)

    out = vilt_self_output(hidden_states, input_tensor, weight, bias)
    out = jax.block_until_ready(out)
    assert out.shape == (B, S, H)

    # correctness check against plain JAX reference: y = x @ W + b (dropout=identity)
    ref = hidden_states.reshape(B * S, H) @ weight + bias
    assert jnp.allclose(out.reshape(B * S, H), ref, atol=1e-5, rtol=1e-5), \
        "kernel output mismatch vs reference"

    print("KERNEL_OK")
</pallas_src>

<mosaic_0001>
module attributes {stable_mosaic.version = 11 : i64} {
  func.func @self_output_kernel(%arg0: i32, %arg1: memref<16x32xf32, #tpu.memory_space<vmem>>, %arg2: memref<32x32xf32, #tpu.memory_space<vmem>>, %arg3: memref<1x32xf32, #tpu.memory_space<vmem>>, %arg4: memref<16x32xf32, #tpu.memory_space<vmem>>) attributes {dimension_semantics = [#tpu.dimension_semantics<parallel>], iteration_bounds = array<i64: 1>, scalar_prefetch = 0 : i64, scratch_operands = 0 : i64, tpu.core_type = #tpu.core_type<tc>, window_params = [{transform_indices = @transform_0, window_bounds = array<i64: 16, 32>}, {pipeline_mode = #tpu.pipeline_mode<synchronous>, transform_indices = @transform_1, window_bounds = array<i64: 32, 32>}, {pipeline_mode = #tpu.pipeline_mode<synchronous>, transform_indices = @transform_2, window_bounds = array<i64: 1, 32>}, {transform_indices = @transform_3, window_bounds = array<i64: 16, 32>}]} {
    %c0 = arith.constant 0 : index
    %c0_0 = arith.constant 0 : index
    %0 = vector.load %arg1[%c0, %c0_0] : memref<16x32xf32, #tpu.memory_space<vmem>>, vector<16x32xf32>
    %c0_1 = arith.constant 0 : index
    %c0_2 = arith.constant 0 : index
    %1 = vector.load %arg2[%c0_1, %c0_2] : memref<32x32xf32, #tpu.memory_space<vmem>>, vector<32x32xf32>
    %cst = arith.constant dense<0.000000e+00> : vector<16x32xf32>
    %2 = tpu.matmul %0, %1, %cst {dimension_numbers = #tpu.dot_dimension_numbers<[1], [0], [0], [1], [0, 0, 1, 1], [], []>} : vector<16x32xf32>, vector<32x32xf32>, vector<16x32xf32> -> vector<16x32xf32>
    %c0_3 = arith.constant 0 : index
    %c0_4 = arith.constant 0 : index
    %3 = vector.load %arg3[%c0_3, %c0_4] : memref<1x32xf32, #tpu.memory_space<vmem>>, vector<1x32xf32>
    %4 = vector.broadcast %3 : vector<1x32xf32> to vector<16x32xf32>
    %5 = arith.addf %2, %4 : vector<16x32xf32>
    %c0_5 = arith.constant 0 : index
    %c0_6 = arith.constant 0 : index
    %6 = vector.load %arg4[%c0_5, %c0_6] : memref<16x32xf32, #tpu.memory_space<vmem>>, vector<16x32xf32>
    tpu.vector_store %arg4[%c0_5, %c0_6], %5 {strides = array<i32>} : memref<16x32xf32, #tpu.memory_space<vmem>>, vector<16x32xf32>,
    return
  }
  func.func @transform_0(%arg0: i32) -> (i32, i32) {
    %c0_i32 = arith.constant 0 : i32
    %c0_i32_0 = arith.constant 0 : i32
    return %arg0, %c0_i32 : i32, i32
  }
  func.func @transform_1(%arg0: i32) -> (i32, i32) {
    %c0_i32 = arith.constant 0 : i32
    %c0_i32_0 = arith.constant 0 : i32
    %c0_i32_1 = arith.constant 0 : i32
    return %c0_i32, %c0_i32_0 : i32, i32
  }
  func.func @transform_2(%arg0: i32) -> (i32, i32) {
    %c0_i32 = arith.constant 0 : i32
    %c0_i32_0 = arith.constant 0 : i32
    %c0_i32_1 = arith.constant 0 : i32
    return %c0_i32, %c0_i32_0 : i32, i32
  }
  func.func @transform_3(%arg0: i32) -> (i32, i32) {
    %c0_i32 = arith.constant 0 : i32
    %c0_i32_0 = arith.constant 0 : i32
    return %arg0, %c0_i32 : i32, i32
  }
}

</mosaic_0001>

<llo_original>
// kernel: tpu_custom_call.1
$region0: #{tpu_custom_call.1}
  #allocation0 [shape = 'u32[]', space=smem, size = 0x4, offset = 0x4, fixed_abs, tag = 'smem constant byte address 0x4 - core index']
  #allocation1 [shape = 'u32[144,128]{1,0:T(1,128)}', space=vmem, size = 0x12000, scoped, tag = 'internal scratch']
  %s0 = inlined_call_operand.hbm [shape: f32[16,32], index: 0, kind: input, shape index: {}]
  %s1 = inlined_call_operand.hbm [shape: f32[32,32], index: 1, kind: input, shape index: {}]
  %s2 = inlined_call_operand.vmem [shape: f32[1,32], index: 2, kind: input, shape index: {}]
  %s3 = inlined_call_operand.hbm [shape: f32[16,32], index: 3, kind: output, shape index: {}]
  %s4 = sld [smem:[#allocation0]]
  $region30: #{tpu_custom_call.1} parent=0
    _
  %s6 = ssub.s32 1, %s4
  %s7 = scalar_select 0, %s6, %s4
  $region1: #{tpu_custom_call.1} parent=0
    #allocation2 [shape = 'u8[8192]{0}', space=vmem, size = 0x2000, scoped, tag = 'input window, operand 0, single buffered']
    #allocation3 [shape = 's32[1]{0}', space=sflag, size = 0x4, scoped, tag = 'scoped memory for tpu_custom_call.1']
    #allocation4 [shape = 's32[1]{0}', space=sflag, size = 0x4, scoped, tag = 'scoped memory for tpu_custom_call.1']
    #allocation5 [shape = 'u8[16384]{0}', space=vmem, size = 0x4000, scoped, tag = 'input window, operand 1, single buffered']
    #allocation6 [shape = 's32[1]{0}', space=sflag, size = 0x4, scoped, tag = 'scoped memory for tpu_custom_call.1']
    #allocation7 [shape = 'u8[8192]{0}', space=vmem, size = 0x2000, scoped, tag = 'output window, operand 0, single buffered']
    %8 = vsyncpa [#allocation3], 0
    %9 = vsyncpa [#allocation6], 0
    %10 = vsyncpa [#allocation4], 0
    // Predicated region
    $region2: #{tpu_custom_call.1} parent=1 // pred_check
      _
    $region3: #{tpu_custom_call.1} parent=1 // pred_check_branch
      %12 = sbr.rel (0) target = $region5
    $region4: #{tpu_custom_call.1} parent=1 // pred_region
      %s14 = ssub.s32 256, 256
      %15 = vsyncadd [#allocation3], %s14
      %s16 = sshll.u32 [#allocation2], 4
      %s17 = int_to_ptr.vmem [resolvable:$true] %s16
      %22 = dma.hbm_to_vmem [thread:$0]  %s0, 256, %s17, [#allocation3], 128, 128, 8
    $region5: #{tpu_custom_call.1} parent=1 // pred_fallthru
      _
    // Predicated region
    $region6: #{tpu_custom_call.1} parent=1 // pred_check
      _
    $region7: #{tpu_custom_call.1} parent=1 // pred_check_branch
      %24 = sbr.rel (0) target = $region9
    $region8: #{tpu_custom_call.1} parent=1 // pred_region
      %s26 = ssub.s32 512, 512
      %27 = vsyncadd [#allocation6], %s26
      %s28 = sshll.u32 [#allocation5], 4
      %s29 = int_to_ptr.vmem [resolvable:$true] %s28
      %34 = dma.hbm_to_vmem [thread:$0]  %s1, 512, %s29, [#allocation6], 128, 128, 8
    $region9: #{tpu_custom_call.1} parent=1 // pred_fallthru
      _
    // Predicated region
    $region10: #{tpu_custom_call.1} parent=1 // pred_check
      _
    $region11: #{tpu_custom_call.1} parent=1 // pred_check_branch
      %36 = sbr.rel (0) target = $region13
    $region12: #{tpu_custom_call.1} parent=1 // pred_region
      _
    $region13: #{tpu_custom_call.1} parent=1 // pred_fallthru
      _
    // Predicated region
    $region14: #{tpu_custom_call.1} parent=1 // pred_check
      _
    $region15: #{tpu_custom_call.1} parent=1 // pred_check_branch
      %38 = sbr.rel (0) target = $region17
    $region16: #{tpu_custom_call.1} parent=1 // pred_region
      %39 = dma.done [#allocation3], 256
    $region17: #{tpu_custom_call.1} parent=1 // pred_fallthru
      _
    // Predicated region
    $region18: #{tpu_custom_call.1} parent=1 // pred_check
      _
    $region19: #{tpu_custom_call.1} parent=1 // pred_check_branch
      %41 = sbr.rel (0) target = $region21
    $region20: #{tpu_custom_call.1} parent=1 // pred_region
      %42 = dma.done [#allocation6], 512
    $region21: #{tpu_custom_call.1} parent=1 // pred_fallthru
      _
    %v43 = vld [vmem:[#allocation2] sm:$0xff]
    %v44 = vld [vmem:[#allocation2 + $0x8] sm:$0xff]
    %v45 = vld [vmem:[#allocation5] sm:$0xff]
    %v46 = vld [vmem:[#allocation5 + $0x8] sm:$0xff]
    %v47 = vld [vmem:[#allocation5 + $0x10] sm:$0xff]
    %v48 = vld [vmem:[#allocation5 + $0x18] sm:$0xff]
    %v49 = vld [vmem:[%s2] sm:$0x1]
    %v51 = vlaneseq
    %v52 = vshrl.u32 %v51, 7
    %v53 = vsub.s32 0, %v52
    %v54 = vrot.slane %v49, %v53
    %vm56 = vcmask 261120
    %v58 = vsel %vm56, %v43, 0
    %v61 = vsel %vm56, %v44, 0
    %63 = vmatprep.subr.mxu0 0.0
    %64 = vmatpush1.msra.mxu0 0.0
    %65 = vmatprep.subr.mxu0 0.0
    %66 = vmatpush1.msra.mxu0 0.0
    %67 = vmatprep.subr.mxu0 0.0
    %68 = vmatpush1.msra.mxu0 0.0
    %69 = vmatprep.subr.mxu0 0.0
    %70 = vmatpush1.msra.mxu0 0.0
    %71 = vmatprep.subr.mxu0 0.0
    %72 = vmatpush1.msra.mxu0 0.0
    %73 = vmatprep.subr.mxu0 0.0
    %74 = vmatpush1.msra.mxu0 0.0
    %75 = vmatprep.subr.mxu0 0.0
    %76 = vmatpush1.msra.mxu0 0.0
    %77 = vmatprep.subr.mxu0 0.0
    %78 = vmatpush1.msra.mxu0 0.0
    %79 = vmatprep.subr.mxu0 0.0
    %80 = vmatpush1.msra.mxu0 0.0
    %81 = vmatprep.subr.mxu0 0.0
    %82 = vmatpush1.msra.mxu0 0.0
    %83 = vmatprep.subr.mxu0 0.0
    %84 = vmatpush1.msra.mxu0 0.0
    %85 = vmatprep.subr.mxu0 0.0
    %86 = vmatpush1.msra.mxu0 0.0
    %87 = vmatprep.subr.mxu0 0.0
    %88 = vmatpush1.msra.mxu0 %v48
    %89 = vmatprep.subr.mxu0 0.0
    %90 = vmatpush1.msra.mxu0 %v47
    %91 = vmatprep.subr.mxu0 0.0
    %92 = vmatpush1.msra.mxu0 %v46
    %93 = vmatprep.subr.mxu0 0.0
    %94 = vmatpush1.msra.mxu0 %v45
    %95 = vmatprep.subr.mxu0 0.0
    %96 = vmatpush2.msra.mxu0 0.0
    %97 = vmatprep.subr.mxu0 0.0
    %98 = vmatpush2.msra.mxu0 0.0
    %99 = vmatprep.subr.mxu0 0.0
    %100 = vmatpush2.msra.mxu0 0.0
    %101 = vmatprep.subr.mxu0 0.0
    %102 = vmatpush2.msra.mxu0 0.0
    %103 = vmatprep.subr.mxu0 0.0
    %104 = vmatpush2.msra.mxu0 0.0
    %105 = vmatprep.subr.mxu0 0.0
    %106 = vmatpush2.msra.mxu0 0.0
    %107 = vmatprep.subr.mxu0 0.0
    %108 = vmatpush2.msra.mxu0 0.0
    %109 = vmatprep.subr.mxu0 0.0
    %110 = vmatpush2.msra.mxu0 0.0
    %111 = vmatprep.subr.mxu0 0.0
    %112 = vmatpush2.msra.mxu0 0.0
    %113 = vmatprep.subr.mxu0 0.0
    %114 = vmatpush2.msra.mxu0 0.0
    %115 = vmatprep.subr.mxu0 0.0
    %116 = vmatpush2.msra.mxu0 0.0
    %117 = vmatprep.subr.mxu0 0.0
    %118 = vmatpush2.msra.mxu0 0.0
    %119 = vmatprep.subr.mxu0 0.0
    %120 = vmatpush2.msra.mxu0 0.0
    %121 = vmatprep.subr.mxu0 0.0
    %122 = vmatpush2.msra.mxu0 0.0
    %123 = vmatprep.subr.mxu0 0.0
    %124 = vmatpush2.msra.mxu0 0.0
    %125 = vmatprep.subr.mxu0 0.0
    %126 = vmatpush2.msra.mxu0 0.0
    %127 = vmatprep.mubr.f32.mxu0 0.0
    %128 = vmatmul.mubr.f32.gmra.mxu0 %v58
    %v129 = vpop.f32.mrf.mxu0
    %v130 = vadd.f32 %v54, %v129
    %v131 = vpop.f32.mrf.mxu0
    %132 = vmatprep.mubr.f32.mxu0 0.0
    %133 = vmatmul.mubr.f32.gmra.mxu0 %v61
    %v134 = vpop.f32.mrf.mxu0
    %v135 = vadd.f32 %v54, %v134
    %v136 = vpop.f32.mrf.mxu0
    %137 = vdwg.mxu0
    %138 = vst.msk [vmem:[#allocation7] sm:$0xff] %vm56, %v130
    %139 = vst.msk [vmem:[#allocation7 + $0x8] sm:$0xff] %vm56, %v135
    // Predicated region
    $region22: #{tpu_custom_call.1} parent=1 // pred_check
      _
    $region23: #{tpu_custom_call.1} parent=1 // pred_check_branch
      %141 = sbr.rel (0) target = $region25
    $region24: #{tpu_custom_call.1} parent=1 // pred_region
      %s143 = ssub.s32 256, 256
      %144 = vsyncadd [#allocation4], %s143
      %s145 = sshll.u32 [#allocation7], 4
      %s146 = int_to_ptr.vmem [resolvable:$true] %s145
      %151 = dma.vmem_to_hbm [thread:$0]  %s146, 256, %s3, [#allocation4], 128, 128, 8
    $region25: #{tpu_custom_call.1} parent=1 // pred_fallthru
      _
    // Predicated region
    $region26: #{tpu_custom_call.1} parent=1 // pred_check
      _
    $region27: #{tpu_custom_call.1} parent=1 // pred_check_branch
      %153 = sbr.rel (0) target = $region29
    $region28: #{tpu_custom_call.1} parent=1 // pred_region
      %154 = dma.done [#allocation4], 256
    $region29: #{tpu_custom_call.1} parent=1 // pred_fallthru
      _
    %155 = vsyncpa [#allocation3], 1
    %156 = vsyncpa [#allocation6], 1
    %157 = vsyncpa [#allocation4], 1

</llo_original>
